<compile_context>
chip_gen: v5e
topology: v5e:2x2
jax: 0.10.0
libtpu: 0.0.40
codegen_flags: <defaults>
</compile_context>

<pallas_src>
import jax
import jax.numpy as jnp
from jax.experimental import pallas as pl
from jax.experimental.pallas import tpu as pltpu

IN_DIM = 12
HID_DIM = 100
HID_PAD = 128   # lane-dense padded hidden width
OUT_DIM = 4
OUT_PAD = 128   # lane-dense padded output width


def qnet_kernel(x_ref, w1_ref, b1_ref, w2_ref, b2_ref, o_ref):
    # x tile: (TB, 12) f32 -> bf16 in-kernel; w1: (12,128) bf16; w2: (128,128) bf16.
    x = x_ref[...].astype(jnp.bfloat16)
    h = jnp.dot(x, w1_ref[...],
                preferred_element_type=jnp.float32)            # (TB, 128) f32 accum
    h = jnp.maximum(h + b1_ref[...], 0.0)                      # bias + ReLU in f32
    y = jnp.dot(h.astype(jnp.bfloat16), w2_ref[...],
                preferred_element_type=jnp.float32)            # (TB, 128) f32 accum
    o_ref[...] = (y + b2_ref[...]).astype(o_ref.dtype)         # dense bf16 store


def prepare_params(w1, b1, w2, b2):
    """One-time parameter prep (call when params change, NOT per forward).

    Pads hidden 100->128 and output 4->128 with zeros and casts matmul weights
    to bf16.  Biases stay f32 (f32 epilogue)."""
    w1p = jnp.zeros((IN_DIM, HID_PAD), jnp.float32).at[:, :HID_DIM].set(w1)
    b1p = jnp.zeros((1, HID_PAD), jnp.float32).at[:, :HID_DIM].set(b1)
    w2p = jnp.zeros((HID_PAD, OUT_PAD), jnp.float32).at[:HID_DIM, :OUT_DIM].set(w2)
    b2p = jnp.zeros((1, OUT_PAD), jnp.float32).at[:, :OUT_DIM].set(b2)
    return w1p.astype(jnp.bfloat16), b1p, w2p.astype(jnp.bfloat16), b2p


def qnet_forward(x, w1p, b1p, w2p, b2p, *, tb_cap=4096):
    """y = relu(x @ W1 + b1) @ W2 + b2 with pre-prepared (padded, bf16) params."""
    B = x.shape[0]

    # Batch tile: multiple of 16 (bf16 output sublane packing), capped at tb_cap,
    # and sized so large batches give >= 2 grid steps (v7x megacore split).
    TB = max(16, min(tb_cap, ((pl.cdiv(B, 2) + 15) // 16) * 16))
    Bp = pl.cdiv(B, TB) * TB
    if Bp != B:
        x = jnp.pad(x, ((0, Bp - B), (0, 0)))

    out = pl.pallas_call(
        qnet_kernel,
        out_shape=jax.ShapeDtypeStruct((Bp, OUT_PAD), jnp.bfloat16),
        grid=(Bp // TB,),
        in_specs=[
            pl.BlockSpec((TB, IN_DIM), lambda i: (i, 0)),         # x: tiled over batch
            pl.BlockSpec((IN_DIM, HID_PAD), lambda i: (0, 0)),    # w1: VMEM-resident
            pl.BlockSpec((1, HID_PAD), lambda i: (0, 0)),         # b1: VMEM-resident
            pl.BlockSpec((HID_PAD, OUT_PAD), lambda i: (0, 0)),   # w2: VMEM-resident
            pl.BlockSpec((1, OUT_PAD), lambda i: (0, 0)),         # b2: VMEM-resident
        ],
        out_specs=pl.BlockSpec((TB, OUT_PAD), lambda i: (i, 0)),
        compiler_params=pltpu.CompilerParams(
            dimension_semantics=("parallel",)),                   # megacore on v7x
    )(x, w1p, b1p, w2p, b2p)

    # NOTE: downstream code that can consume the padded (Bp,128) bf16 block
    # directly (restricting argmax etc. to the first 4 lanes) should do so to
    # avoid this extra slice/cast dispatch in latency-bound loops.
    return out[:B, :OUT_DIM].astype(jnp.float32)


def qnet_reference(x, w1, b1, w2, b2):
    """Plain-JAX reference with the same precision recipe (bf16 in, f32 accumulate)."""
    h = jnp.dot(x.astype(jnp.bfloat16), w1.astype(jnp.bfloat16),
                preferred_element_type=jnp.float32)
    h = jnp.maximum(h + b1, 0.0)
    y = jnp.dot(h.astype(jnp.bfloat16), w2.astype(jnp.bfloat16),
                preferred_element_type=jnp.float32)
    return y + b2


def init_params(key):
    """Deterministic init matching nn.Linear default: U(-1/sqrt(fan_in), 1/sqrt(fan_in))."""
    k1, k2, k3, k4 = jax.random.split(key, 4)
    lim1 = 1.0 / jnp.sqrt(jnp.float32(IN_DIM))
    lim2 = 1.0 / jnp.sqrt(jnp.float32(HID_DIM))
    w1 = jax.random.uniform(k1, (IN_DIM, HID_DIM), jnp.float32, -lim1, lim1)
    b1 = jax.random.uniform(k2, (1, HID_DIM), jnp.float32, -lim1, lim1)
    w2 = jax.random.uniform(k3, (HID_DIM, OUT_DIM), jnp.float32, -lim2, lim2)
    b2 = jax.random.uniform(k4, (1, OUT_DIM), jnp.float32, -lim2, lim2)
    return w1, b1, w2, b2


if __name__ == "__main__":
    key = jax.random.PRNGKey(0)
    pkey, xkey = jax.random.split(key)
    w1, b1, w2, b2 = init_params(pkey)

    # Hoisted, one-time parameter prep (padding + bf16 casts).
    w1p, b1p, w2p, b2p = prepare_params(w1, b1, w2, b2)

    # Small batch of 12-dim state vectors (GridWorld one-hot states in the chapter).
    B = 2
    x = jax.random.uniform(xkey, (B, IN_DIM), jnp.float32)

    y = qnet_forward(x, w1p, b1p, w2p, b2p)
    y = jax.block_until_ready(y)

    y_ref = qnet_reference(x, w1, b1, w2, b2)
    assert y.shape == (B, OUT_DIM)
    assert jnp.allclose(y, y_ref, atol=2e-2, rtol=2e-2), float(
        jnp.max(jnp.abs(y - y_ref)))

    print("KERNEL_OK")
</pallas_src>

<mosaic_0001>
module attributes {stable_mosaic.version = 11 : i64} {
  func.func @qnet_kernel(%arg0: i32, %arg1: memref<16x12xf32, #tpu.memory_space<vmem>>, %arg2: memref<12x128xbf16, #tpu.memory_space<vmem>>, %arg3: memref<1x128xf32, #tpu.memory_space<vmem>>, %arg4: memref<128x128xbf16, #tpu.memory_space<vmem>>, %arg5: memref<1x128xf32, #tpu.memory_space<vmem>>, %arg6: memref<16x128xbf16, #tpu.memory_space<vmem>>) attributes {dimension_semantics = [#tpu.dimension_semantics<parallel>], iteration_bounds = array<i64: 1>, scalar_prefetch = 0 : i64, scratch_operands = 0 : i64, tpu.core_type = #tpu.core_type<tc>, window_params = [{transform_indices = @transform_0, window_bounds = array<i64: 16, 12>}, {pipeline_mode = #tpu.pipeline_mode<synchronous>, transform_indices = @transform_1, window_bounds = array<i64: 12, 128>}, {pipeline_mode = #tpu.pipeline_mode<synchronous>, transform_indices = @transform_2, window_bounds = array<i64: 1, 128>}, {pipeline_mode = #tpu.pipeline_mode<synchronous>, transform_indices = @transform_3, window_bounds = array<i64: 128, 128>}, {pipeline_mode = #tpu.pipeline_mode<synchronous>, transform_indices = @transform_4, window_bounds = array<i64: 1, 128>}, {transform_indices = @transform_5, window_bounds = array<i64: 16, 128>}]} {
    %c0 = arith.constant 0 : index
    %c0_0 = arith.constant 0 : index
    %0 = vector.load %arg1[%c0, %c0_0] : memref<16x12xf32, #tpu.memory_space<vmem>>, vector<16x12xf32>
    %1 = arith.truncf %0 : vector<16x12xf32> to vector<16x12xbf16>
    %c0_1 = arith.constant 0 : index
    %c0_2 = arith.constant 0 : index
    %2 = vector.load %arg2[%c0_1, %c0_2] : memref<12x128xbf16, #tpu.memory_space<vmem>>, vector<12x128xbf16>
    %cst = arith.constant dense<0.000000e+00> : vector<16x128xf32>
    %3 = tpu.matmul %1, %2, %cst {dimension_numbers = #tpu.dot_dimension_numbers<[1], [0], [0], [1], [0, 0, 1, 1], [], []>} : vector<16x12xbf16>, vector<12x128xbf16>, vector<16x128xf32> -> vector<16x128xf32>
    %c0_3 = arith.constant 0 : index
    %c0_4 = arith.constant 0 : index
    %4 = vector.load %arg3[%c0_3, %c0_4] : memref<1x128xf32, #tpu.memory_space<vmem>>, vector<1x128xf32>
    %5 = vector.broadcast %4 : vector<1x128xf32> to vector<16x128xf32>
    %6 = arith.addf %3, %5 : vector<16x128xf32>
    %cst_5 = arith.constant 0.000000e+00 : f32
    %7 = vector.broadcast %cst_5 : f32 to vector<16x128xf32>
    %8 = arith.maximumf %6, %7 : vector<16x128xf32>
    %9 = arith.truncf %8 : vector<16x128xf32> to vector<16x128xbf16>
    %c0_6 = arith.constant 0 : index
    %c0_7 = arith.constant 0 : index
    %10 = vector.load %arg4[%c0_6, %c0_7] : memref<128x128xbf16, #tpu.memory_space<vmem>>, vector<128x128xbf16>
    %cst_8 = arith.constant dense<0.000000e+00> : vector<16x128xf32>
    %11 = tpu.matmul %9, %10, %cst_8 {dimension_numbers = #tpu.dot_dimension_numbers<[1], [0], [0], [1], [0, 0, 1, 1], [], []>} : vector<16x128xbf16>, vector<128x128xbf16>, vector<16x128xf32> -> vector<16x128xf32>
    %c0_9 = arith.constant 0 : index
    %c0_10 = arith.constant 0 : index
    %12 = vector.load %arg5[%c0_9, %c0_10] : memref<1x128xf32, #tpu.memory_space<vmem>>, vector<1x128xf32>
    %13 = vector.broadcast %12 : vector<1x128xf32> to vector<16x128xf32>
    %14 = arith.addf %11, %13 : vector<16x128xf32>
    %15 = arith.truncf %14 : vector<16x128xf32> to vector<16x128xbf16>
    %c0_11 = arith.constant 0 : index
    %c0_12 = arith.constant 0 : index
    %16 = vector.load %arg6[%c0_11, %c0_12] : memref<16x128xbf16, #tpu.memory_space<vmem>>, vector<16x128xbf16>
    tpu.vector_store %arg6[%c0_11, %c0_12], %15 {strides = array<i32>} : memref<16x128xbf16, #tpu.memory_space<vmem>>, vector<16x128xbf16>,
    return
  }
  func.func @transform_0(%arg0: i32) -> (i32, i32) {
    %c0_i32 = arith.constant 0 : i32
    %c0_i32_0 = arith.constant 0 : i32
    return %arg0, %c0_i32 : i32, i32
  }
  func.func @transform_1(%arg0: i32) -> (i32, i32) {
    %c0_i32 = arith.constant 0 : i32
    %c0_i32_0 = arith.constant 0 : i32
    %c0_i32_1 = arith.constant 0 : i32
    return %c0_i32, %c0_i32_0 : i32, i32
  }
  func.func @transform_2(%arg0: i32) -> (i32, i32) {
    %c0_i32 = arith.constant 0 : i32
    %c0_i32_0 = arith.constant 0 : i32
    %c0_i32_1 = arith.constant 0 : i32
    return %c0_i32, %c0_i32_0 : i32, i32
  }
  func.func @transform_3(%arg0: i32) -> (i32, i32) {
    %c0_i32 = arith.constant 0 : i32
    %c0_i32_0 = arith.constant 0 : i32
    %c0_i32_1 = arith.constant 0 : i32
    return %c0_i32, %c0_i32_0 : i32, i32
  }
  func.func @transform_4(%arg0: i32) -> (i32, i32) {
    %c0_i32 = arith.constant 0 : i32
    %c0_i32_0 = arith.constant 0 : i32
    %c0_i32_1 = arith.constant 0 : i32
    return %c0_i32, %c0_i32_0 : i32, i32
  }
  func.func @transform_5(%arg0: i32) -> (i32, i32) {
    %c0_i32 = arith.constant 0 : i32
    %c0_i32_0 = arith.constant 0 : i32
    return %arg0, %c0_i32 : i32, i32
  }
}

</mosaic_0001>

<llo_original>
// kernel: tpu_custom_call.1
$region0: #{tpu_custom_call.1}
  #allocation0 [shape = 'u32[]', space=smem, size = 0x4, offset = 0x4, fixed_abs, tag = 'smem constant byte address 0x4 - core index']
  #allocation1 [shape = 'u32[72,128]{1,0:T(1,128)}', space=vmem, size = 0x9000, scoped, tag = 'internal scratch']
  %s0 = inlined_call_operand.hbm [shape: f32[16,12], index: 0, kind: input, shape index: {}]
  %s1 = inlined_call_operand.hbm [shape: bf16[12,128], index: 1, kind: input, shape index: {}]
  %s2 = inlined_call_operand.vmem [shape: f32[1,128], index: 2, kind: input, shape index: {}]
  %s3 = inlined_call_operand.hbm [shape: bf16[128,128], index: 3, kind: input, shape index: {}]
  %s4 = inlined_call_operand.vmem [shape: f32[1,128], index: 4, kind: input, shape index: {}]
  %s5 = inlined_call_operand.hbm [shape: bf16[16,128], index: 5, kind: output, shape index: {}]
  %s6 = sld [smem:[#allocation0]]
  $region42: #{tpu_custom_call.1} parent=0
    _
  %s8 = ssub.s32 1, %s6
  %s9 = scalar_select 0, %s8, %s6
  $region1: #{tpu_custom_call.1} parent=0
    #allocation2 [shape = 'u8[8192]{0}', space=vmem, size = 0x2000, scoped, tag = 'input window, operand 0, single buffered']
    #allocation3 [shape = 's32[1]{0}', space=sflag, size = 0x4, scoped, tag = 'scoped memory for tpu_custom_call.1']
    #allocation4 [shape = 's32[1]{0}', space=sflag, size = 0x4, scoped, tag = 'scoped memory for tpu_custom_call.1']
    #allocation5 [shape = 'u8[4096]{0}', space=vmem, size = 0x1000, scoped, tag = 'input window, operand 1, single buffered']
    #allocation6 [shape = 's32[1]{0}', space=sflag, size = 0x4, scoped, tag = 'scoped memory for tpu_custom_call.1']
    #allocation7 [shape = 'u8[32768]{0}', space=vmem, size = 0x8000, scoped, tag = 'input window, operand 3, single buffered']
    #allocation8 [shape = 'u8[4096]{0}', space=vmem, size = 0x1000, scoped, tag = 'output window, operand 0, single buffered']
    %10 = vsyncpa [#allocation3], 0
    %11 = vsyncpa [#allocation6], 0
    %12 = vsyncpa [#allocation4], 0
    // Predicated region
    $region2: #{tpu_custom_call.1} parent=1 // pred_check
      _
    $region3: #{tpu_custom_call.1} parent=1 // pred_check_branch
      %14 = sbr.rel (0) target = $region5
    $region4: #{tpu_custom_call.1} parent=1 // pred_region
      %16 = vsyncadd [#allocation3], 0
      %s17 = sshll.u32 %s0, 4
      %s18 = int_to_ptr.hbm [resolvable:$true] %s17
      %s19 = sshll.u32 [#allocation2], 4
      %s20 = int_to_ptr.vmem [resolvable:$true] %s19
      %25 = dma.hbm_to_vmem [thread:$0]  %s18, 256, %s20, [#allocation3], 128, 128, 8
    $region5: #{tpu_custom_call.1} parent=1 // pred_fallthru
      _
    // Predicated region
    $region6: #{tpu_custom_call.1} parent=1 // pred_check
      _
    $region7: #{tpu_custom_call.1} parent=1 // pred_check_branch
      %27 = sbr.rel (0) target = $region9
    $region8: #{tpu_custom_call.1} parent=1 // pred_region
      %29 = vsyncadd [#allocation6], 0
      %s30 = sshll.u32 %s1, 4
      %s31 = int_to_ptr.hbm [resolvable:$true] %s30
      %s32 = sshll.u32 [#allocation5], 4
      %s33 = int_to_ptr.vmem [resolvable:$true] %s32
      %38 = dma.hbm_to_vmem [thread:$0]  %s31, 128, %s33, [#allocation6], 64, 64, 4
    $region9: #{tpu_custom_call.1} parent=1 // pred_fallthru
      _
    // Predicated region
    $region10: #{tpu_custom_call.1} parent=1 // pred_check
      _
    $region11: #{tpu_custom_call.1} parent=1 // pred_check_branch
      %40 = sbr.rel (0) target = $region13
    $region12: #{tpu_custom_call.1} parent=1 // pred_region
      _
    $region13: #{tpu_custom_call.1} parent=1 // pred_fallthru
      _
    // Predicated region
    $region14: #{tpu_custom_call.1} parent=1 // pred_check
      _
    $region15: #{tpu_custom_call.1} parent=1 // pred_check_branch
      %42 = sbr.rel (0) target = $region17
    $region16: #{tpu_custom_call.1} parent=1 // pred_region
      %44 = vsyncadd [#allocation6], 0
      %s45 = sshll.u32 %s3, 4
      %s46 = int_to_ptr.hbm [resolvable:$true] %s45
      %s47 = sshll.u32 [#allocation7], 4
      %s48 = int_to_ptr.vmem [resolvable:$true] %s47
      %53 = dma.hbm_to_vmem [thread:$0]  %s46, 1024, %s48, [#allocation6], 64, 64, 4
    $region17: #{tpu_custom_call.1} parent=1 // pred_fallthru
      _
    // Predicated region
    $region18: #{tpu_custom_call.1} parent=1 // pred_check
      _
    $region19: #{tpu_custom_call.1} parent=1 // pred_check_branch
      %55 = sbr.rel (0) target = $region21
    $region20: #{tpu_custom_call.1} parent=1 // pred_region
      _
    $region21: #{tpu_custom_call.1} parent=1 // pred_fallthru
      _
    // Predicated region
    $region22: #{tpu_custom_call.1} parent=1 // pred_check
      _
    $region23: #{tpu_custom_call.1} parent=1 // pred_check_branch
      %57 = sbr.rel (0) target = $region25
    $region24: #{tpu_custom_call.1} parent=1 // pred_region
      %59 = dma.done [#allocation3], 256
    $region25: #{tpu_custom_call.1} parent=1 // pred_fallthru
      _
    // Predicated region
    $region26: #{tpu_custom_call.1} parent=1 // pred_check
      _
    $region27: #{tpu_custom_call.1} parent=1 // pred_check_branch
      %61 = sbr.rel (0) target = $region29
    $region28: #{tpu_custom_call.1} parent=1 // pred_region
      %63 = dma.done [#allocation6], 128
    $region29: #{tpu_custom_call.1} parent=1 // pred_fallthru
      _
    // Predicated region
    $region30: #{tpu_custom_call.1} parent=1 // pred_check
      _
    $region31: #{tpu_custom_call.1} parent=1 // pred_check_branch
      %65 = sbr.rel (0) target = $region33
    $region32: #{tpu_custom_call.1} parent=1 // pred_region
      %67 = dma.done [#allocation6], 1024
    $region33: #{tpu_custom_call.1} parent=1 // pred_fallthru
      _
    %v69 = vld [vmem:[#allocation2] sm:$0xff]
    %v70 = vld [vmem:[#allocation2 + $0x8] sm:$0xff]
    %v71 = vpack.c.bf16 %v70, %v69
    %v72 = vld [vmem:[#allocation5] sm:$0xf]
    %v73 = vld [vmem:[#allocation5 + $0x4] sm:$0x3]
    %v74 = vld [vmem:[%s2] sm:$0x1]
    %v76 = vperm.slane %v74, 0
    %v80 = vunpack.c.l.b16 %v72
    %v81 = vunpack.c.l.b16 %v73
    %v82 = vpack.c.b16 %v81, %v80
    %vm83 = vcmask 97280
    %v85 = vsel %vm83, %v71, 0
    %vm87 = vcmask 1045504
    %v89 = vsel %vm87, %v82, 0
    %91 = vmatpush.bf16.msra.mxu0 0
    %92 = vmatpush.bf16.msra.mxu0 0
    %93 = vmatpush.bf16.msra.mxu0 0
    %94 = vmatpush.bf16.msra.mxu0 0
    %95 = vmatpush.bf16.msra.mxu0 0
    %96 = vmatpush.bf16.msra.mxu0 0
    %97 = vmatpush.bf16.msra.mxu0 0
    %98 = vmatpush.bf16.msra.mxu0 %v89
    %99 = vmatmul.bf16.gmra.mxu0 %v85
    %v100 = vpop.f32.mrf.mxu0
    %v101 = vadd.f32 %v76, %v100
    %v102 = vpop.f32.mrf.mxu0
    %v103 = vadd.f32 %v76, %v102
    %104 = vdwg.mxu0
    %v105 = vmax.f32 %v101, 0.0
    %v106 = vmax.f32 %v103, 0.0
    %v107 = vpack.c.bf16 %v106, %v105
    %v108 = vld [vmem:[#allocation7] sm:$0xf]
    %v109 = vld [vmem:[#allocation7 + $0x4] sm:$0xf]
    %v110 = vld [vmem:[#allocation7 + $0x8] sm:$0xf]
    %v111 = vld [vmem:[#allocation7 + $0xc] sm:$0xf]
    %v112 = vld [vmem:[#allocation7 + $0x10] sm:$0xf]
    %v113 = vld [vmem:[#allocation7 + $0x14] sm:$0xf]
    %v114 = vld [vmem:[#allocation7 + $0x18] sm:$0xf]
    %v115 = vld [vmem:[#allocation7 + $0x1c] sm:$0xf]
    %v116 = vld [vmem:[#allocation7 + $0x20] sm:$0xf]
    %v117 = vld [vmem:[#allocation7 + $0x24] sm:$0xf]
    %v118 = vld [vmem:[#allocation7 + $0x28] sm:$0xf]
    %v119 = vld [vmem:[#allocation7 + $0x2c] sm:$0xf]
    %v120 = vld [vmem:[#allocation7 + $0x30] sm:$0xf]
    %v121 = vld [vmem:[#allocation7 + $0x34] sm:$0xf]
    %v122 = vld [vmem:[#allocation7 + $0x38] sm:$0xf]
    %v123 = vld [vmem:[#allocation7 + $0x3c] sm:$0xf]
    %v124 = vld [vmem:[%s4] sm:$0x1]
    %v126 = vperm.slane %v124, 0
    %v144 = vunpack.c.l.b16 %v108
    %v145 = vunpack.c.l.b16 %v109
    %v146 = vunpack.c.l.b16 %v110
    %v147 = vunpack.c.l.b16 %v111
    %v148 = vunpack.c.l.b16 %v112
    %v149 = vunpack.c.l.b16 %v113
    %v150 = vunpack.c.l.b16 %v114
    %v151 = vunpack.c.l.b16 %v115
    %v152 = vunpack.c.l.b16 %v116
    %v153 = vunpack.c.l.b16 %v117
    %v154 = vunpack.c.l.b16 %v118
    %v155 = vunpack.c.l.b16 %v119
    %v156 = vunpack.c.l.b16 %v120
    %v157 = vunpack.c.l.b16 %v121
    %v158 = vunpack.c.l.b16 %v122
    %v159 = vunpack.c.l.b16 %v123
    %v160 = vpack.c.b16 %v145, %v144
    %v161 = vpack.c.b16 %v147, %v146
    %v162 = vpack.c.b16 %v149, %v148
    %v163 = vpack.c.b16 %v151, %v150
    %v164 = vpack.c.b16 %v153, %v152
    %v165 = vpack.c.b16 %v155, %v154
    %v166 = vpack.c.b16 %v157, %v156
    %v167 = vpack.c.b16 %v159, %v158
    %176 = vmatpush.bf16.msra.mxu0 %v167
    %177 = vmatpush.bf16.msra.mxu0 %v166
    %178 = vmatpush.bf16.msra.mxu0 %v165
    %179 = vmatpush.bf16.msra.mxu0 %v164
    %180 = vmatpush.bf16.msra.mxu0 %v163
    %181 = vmatpush.bf16.msra.mxu0 %v162
    %182 = vmatpush.bf16.msra.mxu0 %v161
    %183 = vmatpush.bf16.msra.mxu0 %v160
    %184 = vmatmul.bf16.gmra.mxu0 %v107
    %v185 = vpop.f32.mrf.mxu0
    %v186 = vadd.f32 %v126, %v185
    %v187 = vpop.f32.mrf.mxu0
    %v188 = vadd.f32 %v126, %v187
    %189 = vdwg.mxu0
    %v190 = vpack.c.bf16 %v186, %v186
    %v191 = vpack.c.bf16 %v188, %v188
    %192 = vst [vmem:[#allocation8] sm:$0xf] %v190
    %193 = vst [vmem:[#allocation8 + $0x4] sm:$0xf] %v191
    // Predicated region
    $region34: #{tpu_custom_call.1} parent=1 // pred_check
      _
    $region35: #{tpu_custom_call.1} parent=1 // pred_check_branch
      %195 = sbr.rel (0) target = $region37
    $region36: #{tpu_custom_call.1} parent=1 // pred_region
      %197 = vsyncadd [#allocation4], 0
      %s198 = sshll.u32 [#allocation8], 4
      %s199 = int_to_ptr.vmem [resolvable:$true] %s198
      %s200 = sshll.u32 %s5, 4
      %s201 = int_to_ptr.hbm [resolvable:$true] %s200
      %206 = dma.vmem_to_hbm [thread:$0]  %s199, 128, %s201, [#allocation4], 64, 64, 4
    $region37: #{tpu_custom_call.1} parent=1 // pred_fallthru
      _
    // Predicated region
    $region38: #{tpu_custom_call.1} parent=1 // pred_check
      _
    $region39: #{tpu_custom_call.1} parent=1 // pred_check_branch
      %208 = sbr.rel (0) target = $region41
    $region40: #{tpu_custom_call.1} parent=1 // pred_region
      %210 = dma.done [#allocation4], 128
    $region41: #{tpu_custom_call.1} parent=1 // pred_fallthru
      _
    %211 = vsyncpa [#allocation3], 1
    %212 = vsyncpa [#allocation6], 1
    %213 = vsyncpa [#allocation4], 1

</llo_original>
